<compile_context>
chip_gen: v7x
topology: tpu7x:2x2x1
jax: 0.10.0
libtpu: 0.0.40
codegen_flags: <defaults>
</compile_context>

<pallas_src>
import jax
import jax.numpy as jnp
from jax.experimental import pallas as pl
from jax.experimental.pallas import tpu as pltpu


def _reshape_kernel(x_ref, o_ref):
    # x_ref holds the full rank-4 (1, 2, 2, 2) tile in VMEM; row-major
    # reshape to (2, 4) happens on the loaded value (one vreg, zero cost).
    o_ref[...] = jnp.reshape(x_ref[...], (2, 4))


@jax.jit
def net_reshape_forward(x: jax.Array) -> jax.Array:
    """Equivalent of torch.reshape(x, (2, 4)) on a contiguous rank-4 input."""
    return pl.pallas_call(
        _reshape_kernel,
        out_shape=jax.ShapeDtypeStruct((2, 4), x.dtype),
        in_specs=[pl.BlockSpec(memory_space=pltpu.MemorySpace.VMEM)],
        out_specs=pl.BlockSpec(memory_space=pltpu.MemorySpace.VMEM),
        cost_estimate=pl.CostEstimate(
            flops=0, transcendentals=0, bytes_accessed=64
        ),
    )(x)


if __name__ == "__main__":
    key = jax.random.PRNGKey(0)
    # Rank-4 f32 input with 8 elements, matching Reshape_F32_R4_3.
    x = jax.random.normal(key, (1, 2, 2, 2), dtype=jnp.float32)

    y = net_reshape_forward(x)
    jax.block_until_ready(y)

    # Correctness: row-major (2, 4) reshape of a contiguous tensor matches
    # torch.reshape bit-for-bit.
    ref = jnp.reshape(x, (2, 4))
    assert y.shape == (2, 4) and y.dtype == jnp.float32
    assert bool(jnp.all(y == ref))

    print("KERNEL_OK")
</pallas_src>

<mosaic_0001>
module attributes {stable_mosaic.version = 11 : i64} {
  func.func @_reshape_kernel(%arg0: memref<1x2x2x2xf32, #tpu.memory_space<vmem>>, %arg1: memref<2x4xf32, #tpu.memory_space<vmem>>) attributes {dimension_semantics = [], scalar_prefetch = 0 : i64, scratch_operands = 0 : i64, tpu.core_type = #tpu.core_type<tc>} {
    %c0 = arith.constant 0 : index
    %c0_0 = arith.constant 0 : index
    %c0_1 = arith.constant 0 : index
    %c0_2 = arith.constant 0 : index
    %0 = vector.load %arg0[%c0, %c0_0, %c0_1, %c0_2] : memref<1x2x2x2xf32, #tpu.memory_space<vmem>>, vector<1x2x2x2xf32>
    %1 = vector.shape_cast %0 : vector<1x2x2x2xf32> to vector<2x4xf32>
    %c0_3 = arith.constant 0 : index
    %c0_4 = arith.constant 0 : index
    %2 = vector.load %arg1[%c0_3, %c0_4] : memref<2x4xf32, #tpu.memory_space<vmem>>, vector<2x4xf32>
    tpu.vector_store %arg1[%c0_3, %c0_4], %1 {strides = array<i32>} : memref<2x4xf32, #tpu.memory_space<vmem>>, vector<2x4xf32>,
    return
  }
}

</mosaic_0001>

<llo_original>
// kernel: net_reshape_forward.1
$region0: #{net_reshape_forward.1}
  #allocation0 [shape = 'u32[]', space=smem, size = 0x4, offset = 0x4, fixed_abs, tag = 'smem constant byte address 0x4 - core index']
  #allocation1 [shape = 'u32[144,128]{1,0:T(1,128)}', space=vmem, size = 0x12000, scoped, tag = 'internal scratch']
  %s0 = inlined_call_operand.hbm [shape: f32[1,2,2,2], index: 0, kind: input, shape index: {}]
  %s1 = inlined_call_operand.hbm [shape: f32[2,4], index: 1, kind: output, shape index: {}]
  %s2 = sld [smem:[#allocation0]]
  $region18: #{net_reshape_forward.1} parent=0
    _
  %s4 = ssub.s32 1, %s2
  %s5 = scalar_select 0, %s4, %s2
  $region1: #{net_reshape_forward.1} parent=0
    #allocation2 [shape = 'u8[2048]{0}', space=vmem, size = 0x800, scoped, tag = 'input window, operand 0, single buffered']
    #allocation3 [shape = 's32[1]{0}', space=sflag, size = 0x4, scoped, tag = 'scoped memory for net_reshape_forward.1']
    #allocation4 [shape = 's32[1]{0}', space=sflag, size = 0x4, scoped, tag = 'scoped memory for net_reshape_forward.1']
    #allocation5 [shape = 'u8[1024]{0}', space=vmem, size = 0x400, scoped, tag = 'output window, operand 0, single buffered']
    %6 = vsyncpa [#allocation3], 0
    %7 = vsyncpa [#allocation4], 0
    // Predicated region
    $region2: #{net_reshape_forward.1} parent=1 // pred_check
      _
    $region3: #{net_reshape_forward.1} parent=1 // pred_check_branch
      %9 = sbr.rel (0) target = $region5
    $region4: #{net_reshape_forward.1} parent=1 // pred_region
      %s11 = ssub.s32 64, 64
      %12 = vsyncadd [#allocation3], %s11
      %s13 = sshll.u32 [#allocation2], 4
      %s14 = int_to_ptr.vmem [resolvable:$true] %s13
      %19 = dma.hbm_to_vmem [thread:$0]  %s0, 64, %s14, [#allocation3], 32, 32, 2
    $region5: #{net_reshape_forward.1} parent=1 // pred_fallthru
      _
    // Predicated region
    $region6: #{net_reshape_forward.1} parent=1 // pred_check
      _
    $region7: #{net_reshape_forward.1} parent=1 // pred_check_branch
      %21 = sbr.rel (0) target = $region9
    $region8: #{net_reshape_forward.1} parent=1 // pred_region
      %22 = dma.done [#allocation3], 64
    $region9: #{net_reshape_forward.1} parent=1 // pred_fallthru
      _
    %v23 = vld [vmem:[#allocation2] sm:$0x3]
    %v24 = vld [vmem:[#allocation2 + $0x2] sm:$0x3]
    %v25 = vcombine.low %v23, %v24
    %v27 = vunpack.c.l.s4 1934713408
    %v28 = vunpack.c.0.s8 %v27
    %v29 = vlaneseq
    %v30 = vshrl.u32 %v29, 7
    %v31 = vsub.s32 %v28, %v30
    %v32 = vrot.slane %v25, %v31
    %v33 = vcombine.high %v32, 0.0
    %35 = vrot.lane.b32.xlu0 %v33, 2
    %v36 = vpop.permute.xlu0 %35
    %vm38 = vcmask 15360
    %v39 = vsel %vm38, %v32, %v36
    %vm40 = vcmask 25600
    %41 = vst.msk [vmem:[#allocation5] sm:$0x3] %vm40, %v39
    // Predicated region
    $region10: #{net_reshape_forward.1} parent=1 // pred_check
      _
    $region11: #{net_reshape_forward.1} parent=1 // pred_check_branch
      %43 = sbr.rel (0) target = $region13
    $region12: #{net_reshape_forward.1} parent=1 // pred_region
      %s45 = ssub.s32 32, 32
      %46 = vsyncadd [#allocation4], %s45
      %s48 = sshll.u32 [#allocation5], 4
      %s49 = int_to_ptr.vmem [resolvable:$true] %s48
      %51 = dma.vmem_to_hbm [thread:$0]  %s49, 32, %s1, [#allocation4]
    $region13: #{net_reshape_forward.1} parent=1 // pred_fallthru
      _
    // Predicated region
    $region14: #{net_reshape_forward.1} parent=1 // pred_check
      _
    $region15: #{net_reshape_forward.1} parent=1 // pred_check_branch
      %53 = sbr.rel (0) target = $region17
    $region16: #{net_reshape_forward.1} parent=1 // pred_region
      %54 = dma.done [#allocation4], 32
    $region17: #{net_reshape_forward.1} parent=1 // pred_fallthru
      _
    %55 = vsyncpa [#allocation3], 1
    %56 = vsyncpa [#allocation4], 1

</llo_original>
